<compile_context>
chip_gen: v5e
topology: v5e:2x2
jax: 0.10.0
libtpu: 0.0.40
codegen_flags: <defaults>
</compile_context>

<pallas_src>
import jax
import jax.numpy as jnp
from jax.experimental import pallas as pl
from jax.experimental.pallas import tpu as pltpu


# ---------------------------------------------------------------------------
# Kernels
# ---------------------------------------------------------------------------

def _pool_kernel(x_ref, sum_ref):
    """Accumulate per-channel sums over the HW axis.

    x_ref:   (1, C, T)  tile of the input (T spatial positions on lanes).
    sum_ref: (1, C, 1)  f32 accumulator, resident across the HW grid axis.
    """
    @pl.when(pl.program_id(1) == 0)
    def _():
        sum_ref[...] = jnp.zeros_like(sum_ref)

    x = x_ref[0].astype(jnp.float32)                       # (C, T)
    sum_ref[0] = sum_ref[0] + jnp.sum(x, axis=-1, keepdims=True)


def _scale_kernel(x_ref, mask_ref, o_ref):
    """Elementwise scale: out = x * mask (mask broadcast along lanes).

    x_ref:    (1, C, T)   tile of the input.
    mask_ref: (1, C, 1)   per-channel gate, already in x.dtype.
    o_ref:    (1, C, T)   output tile (lane-dense store).
    """
    o_ref[0] = x_ref[0] * mask_ref[0]


# ---------------------------------------------------------------------------
# Wrapper
# ---------------------------------------------------------------------------

def _pick_hw_tile(HW, C, itemsize, budget_bytes=4 * 1024 * 1024):
    """Largest HW tile (multiple of 128, dividing HW) whose (C, T) slab fits
    `budget_bytes`.  Double-buffered in+out then stays <= ~4x the budget,
    comfortably under the scoped-VMEM limit on v5e/v6e/v7x."""
    if HW % 128 != 0:
        return HW                          # fall back to full-extent block
    max_elems = max(128, budget_bytes // max(1, C * itemsize))
    T = max(128, min((max_elems // 128) * 128, HW))
    while HW % T != 0:
        T -= 128
    return T


def se_layer(x_nchw, w1, b1, w2, b2):
    """x_nchw: (B, C, H, W).  w1: (C, Cr), b1: (1, Cr), w2: (Cr, C), b2: (1, C)."""
    B, C, H, W = x_nchw.shape
    HW = H * W

    # Free reshape of NCHW -> (B, C, HW); no transposes, no extra HBM passes.
    x = x_nchw.reshape(B, C, HW)

    T = _pick_hw_tile(HW, C, jnp.dtype(x.dtype).itemsize)
    n_hw = HW // T
    cparams = pltpu.CompilerParams(
        dimension_semantics=("parallel", "arbitrary"),
        vmem_limit_bytes=32 * 1024 * 1024,
    )

    # ---- Pass 1: global average pool (sum accumulation in f32) ------------
    sums = pl.pallas_call(
        _pool_kernel,
        out_shape=jax.ShapeDtypeStruct((B, C, 1), jnp.float32),
        grid_spec=pltpu.PrefetchScalarGridSpec(
            num_scalar_prefetch=0,
            grid=(B, n_hw),
            in_specs=[pl.BlockSpec((1, C, T), lambda b, s: (b, 0, s))],
            out_specs=pl.BlockSpec((1, C, 1), lambda b, s: (b, 0, 0)),
        ),
        compiler_params=cparams,
    )(x)

    # ---- Excite MLP: tiny, batched over B, done in plain XLA --------------
    mean = sums[:, :, 0] * (1.0 / HW)                         # (B, C) f32
    h = jnp.maximum(mean @ w1.astype(jnp.float32) + b1.astype(jnp.float32), 0.0)
    mask = jax.nn.sigmoid(h @ w2.astype(jnp.float32) + b2.astype(jnp.float32))
    mask = mask.astype(x.dtype).reshape(B, C, 1)              # (B, C, 1)

    # ---- Pass 2: elementwise scale, lane-dense tiles, fully parallel ------
    out = pl.pallas_call(
        _scale_kernel,
        out_shape=jax.ShapeDtypeStruct((B, C, HW), x.dtype),
        grid_spec=pltpu.PrefetchScalarGridSpec(
            num_scalar_prefetch=0,
            grid=(B, n_hw),
            in_specs=[
                pl.BlockSpec((1, C, T), lambda b, s: (b, 0, s)),
                pl.BlockSpec((1, C, 1), lambda b, s: (b, 0, 0)),
            ],
            out_specs=pl.BlockSpec((1, C, T), lambda b, s: (b, 0, s)),
        ),
        compiler_params=pltpu.CompilerParams(
            dimension_semantics=("parallel", "parallel"),
            vmem_limit_bytes=32 * 1024 * 1024,
        ),
    )(x, mask)

    return out.reshape(B, C, H, W)


# ---------------------------------------------------------------------------
# Reference + test
# ---------------------------------------------------------------------------

def _reference(x_nchw, w1, b1, w2, b2):
    """Pure-JAX reference matching the PyTorch forward."""
    mean = jnp.mean(x_nchw, axis=(2, 3))                 # (B, C)
    h = jnp.maximum(mean @ w1 + b1, 0.0)                 # (B, Cr)
    mask = jax.nn.sigmoid(h @ w2 + b2)                   # (B, C)
    return x_nchw * mask[:, :, None, None]


if __name__ == "__main__":
    B, C, H, W = 2, 32, 16, 16          # num_filter=32 -> reduction to 32//16 = 2
    Cr = C // 16

    key = jax.random.PRNGKey(0)
    kx, k1, kb1, k2, kb2 = jax.random.split(key, 5)

    x = jax.random.normal(kx, (B, C, H, W), dtype=jnp.float32)
    # 1x1 conv weights (out_ch, in_ch, 1, 1) stored as dense (in_ch, out_ch).
    w1 = jax.random.normal(k1, (C, Cr), dtype=jnp.float32) * 0.1
    b1 = jax.random.normal(kb1, (1, Cr), dtype=jnp.float32) * 0.1
    w2 = jax.random.normal(k2, (Cr, C), dtype=jnp.float32) * 0.1
    b2 = jax.random.normal(kb2, (1, C), dtype=jnp.float32) * 0.1

    out = se_layer(x, w1, b1, w2, b2)
    jax.block_until_ready(out)

    ref = _reference(x, w1, b1, w2, b2)
    assert out.shape == x.shape
    assert jnp.allclose(out, ref, atol=1e-5, rtol=1e-5), "mismatch vs reference"

    print("KERNEL_OK")
</pallas_src>

<mosaic_0001>
module attributes {stable_mosaic.version = 11 : i64} {
  func.func @_pool_kernel(%arg0: i32, %arg1: i32, %arg2: memref<1x32x256xf32, #tpu.memory_space<vmem>>, %arg3: memref<1x32x1xf32, #tpu.memory_space<vmem>>) attributes {dimension_semantics = [#tpu.dimension_semantics<parallel>, #tpu.dimension_semantics<arbitrary>], iteration_bounds = array<i64: 2, 1>, scalar_prefetch = 0 : i64, scratch_operands = 0 : i64, tpu.core_type = #tpu.core_type<tc>, window_params = [{transform_indices = @transform_0, window_bounds = array<i64: 1, 32, 256>}, {transform_indices = @transform_1, window_bounds = array<i64: 1, 32, 1>}]} {
    %c0_i32 = arith.constant 0 : i32
    %0 = arith.cmpi eq, %arg1, %c0_i32 : i32
    %1 = arith.extui %0 : i1 to i32
    %c0_i32_0 = arith.constant 0 : i32
    %2 = arith.cmpi ne, %1, %c0_i32_0 : i32
    scf.if %2 {
      %cst_9 = arith.constant 0.000000e+00 : f32
      %13 = vector.broadcast %cst_9 : f32 to vector<1x32x1xf32>
      %c0_10 = arith.constant 0 : index
      %c0_11 = arith.constant 0 : index
      %c0_12 = arith.constant 0 : index
      %14 = vector.load %arg3[%c0_10, %c0_11, %c0_12] : memref<1x32x1xf32, #tpu.memory_space<vmem>>, vector<1x32x1xf32>
      tpu.vector_store %arg3[%c0_10, %c0_11, %c0_12], %13 {strides = array<i32>} : memref<1x32x1xf32, #tpu.memory_space<vmem>>, vector<1x32x1xf32>,
    } else {
    }
    %c0 = arith.constant 0 : index
    %c0_1 = arith.constant 0 : index
    %c0_2 = arith.constant 0 : index
    %3 = vector.load %arg2[%c0, %c0_1, %c0_2] : memref<1x32x256xf32, #tpu.memory_space<vmem>>, vector<1x32x256xf32>
    %4 = vector.shape_cast %3 : vector<1x32x256xf32> to vector<32x256xf32>
    %c0_3 = arith.constant 0 : index
    %c0_4 = arith.constant 0 : index
    %c0_5 = arith.constant 0 : index
    %5 = vector.load %arg3[%c0_3, %c0_4, %c0_5] : memref<1x32x1xf32, #tpu.memory_space<vmem>>, vector<1x32x1xf32>
    %6 = vector.shape_cast %5 : vector<1x32x1xf32> to vector<32x1xf32>
    %cst = arith.constant dense<0.000000e+00> : vector<32xf32>
    %7 = vector.multi_reduction <add>, %4, %cst [1] : vector<32x256xf32> to vector<32xf32>
    %8 = vector.shape_cast %7 : vector<32xf32> to vector<32x1xf32>
    %9 = arith.addf %6, %8 : vector<32x1xf32>
    %c0_6 = arith.constant 0 : index
    %c0_7 = arith.constant 0 : index
    %c0_8 = arith.constant 0 : index
    %10 = vector.load %arg3[%c0_6, %c0_7, %c0_8] : memref<1x32x1xf32, #tpu.memory_space<vmem>>, vector<1x32x1xf32>
    %11 = vector.shape_cast %10 : vector<1x32x1xf32> to vector<32x1xf32>
    %12 = vector.shape_cast %9 : vector<32x1xf32> to vector<1x32x1xf32>
    tpu.vector_store %arg3[%c0_6, %c0_7, %c0_8], %12 {strides = array<i32>} : memref<1x32x1xf32, #tpu.memory_space<vmem>>, vector<1x32x1xf32>,
    return
  }
  func.func @transform_0(%arg0: i32, %arg1: i32) -> (i32, i32, i32) {
    %c0_i32 = arith.constant 0 : i32
    %c0_i32_0 = arith.constant 0 : i32
    return %arg0, %c0_i32, %arg1 : i32, i32, i32
  }
  func.func @transform_1(%arg0: i32, %arg1: i32) -> (i32, i32, i32) {
    %c0_i32 = arith.constant 0 : i32
    %c0_i32_0 = arith.constant 0 : i32
    %c0_i32_1 = arith.constant 0 : i32
    return %arg0, %c0_i32, %c0_i32_0 : i32, i32, i32
  }
}

</mosaic_0001>

<llo_original>
// kernel: tpu_custom_call.1
$region0: #{tpu_custom_call.1}
  #allocation0 [shape = 'u32[]', space=smem, size = 0x4, offset = 0x4, fixed_abs, tag = 'smem constant byte address 0x4 - core index']
  #allocation1 [shape = 'u32[72,128]{1,0:T(1,128)}', space=vmem, size = 0x9000, scoped, tag = 'internal scratch']
  %s0 = inlined_call_operand.hbm [shape: f32[2,32,256], index: 0, kind: input, shape index: {}]
  %s1 = inlined_call_operand.vmem [shape: f32[2,32,1], index: 1, kind: output, shape index: {}]
  %s2 = sld [smem:[#allocation0]]
  $region45: #{tpu_custom_call.1} parent=0
    _
  %s4 = ssub.s32 1, %s2
  %s5 = scalar_select 0, %s4, %s2
  $region1: #{tpu_custom_call.1} parent=0
    #allocation2 [shape = 'u8[65536]{0}', space=vmem, size = 0x10000, scoped, tag = 'input window, operand 0']
    #allocation3 [shape = 's32[2]{0}', space=sflag, size = 0x8, scoped, tag = 'scoped memory for tpu_custom_call.1']
    %6 = vsyncpa [#allocation3], 0
    %s7 = scalar_lea.sflag [#allocation3], 1
    %8 = vsyncpa %s7, 0
    loop: start=0, step=1, limit=4
    $region2: #{tpu_custom_call.1} parent=1 // loop_pre_header
      _
    $region3: #{tpu_custom_call.1} parent=1 // loop_header
      %s10 = sphi 0, %s14
      %p11 = scmp.ge.s32.totalorder %s10, 4
      %s17 = sphi 0, %s29
      %s18 = sphi 0, %s25
      %s19 = sphi 0, %s17
      %s20 = sphi 0, %s18
      %s21 = sphi 0, %s19
      %s22 = sphi 0, %s20
      %s34 = sphi 0, %s36
      %s37 = sphi 0, %s34
      %s38 = sphi 0, %s37
      %s54 = sphi 0, %s38
      %s60 = sphi 0, %s62
      %s63 = sphi 0, %s60
      %s64 = sphi 0, %s63
      %s80 = sphi 0, %s64
    $region4: #{tpu_custom_call.1} parent=1 // loop_header_branch
      %13 = sbr.rel (%p11) target = $region8
    $region5: #{tpu_custom_call.1} parent=1 // loop_body
      %s15 = ssub.s32 %s10, 1
      %s16 = ssub.s32 %s10, 2
      %s23 = sadd.s32 1, %s18
      %p24 = scmp.ge.s32.totalorder %s23, 1
      %s25 = scalar_select %p24, 0, %s23
      %s26 = sadd.s32 1, %s17
      %s27 = scalar_select %p24, %s26, %s17
      %p28 = scmp.ge.s32.totalorder %s27, 2
      %s29 = scalar_select %p28, 0, %s27
      %s30 = ssub.s32 %s17, %s29
      %s31 = ssub.s32 %s18, %s25
      %s32 = sor.u32 %s30, %s31
      %p33 = scmp.eq.s32.totalorder %s32, 0
      %s35 = sadd.s32 %s34, 1
      %s36 = scalar_select %p33, %s34, %s35
      %p39 = pneg %p33
      %p40 = scmp.eq.s32.totalorder %s10, 1
      %p41 = por %p39, %p40
      %p42 = scmp.ne.s32.totalorder %s34, %s37
      %p43 = scmp.eq.s32.totalorder %s10, 0
      %p44 = por %p42, %p43
      %p45 = scmp.ne.s32.totalorder %s34, %s37
      %p46 = scmp.eq.s32.totalorder %s15, 1
      %p47 = por %p45, %p46
      %p48 = scmp.ne.s32.totalorder %s37, %s38
      %p49 = scmp.eq.s32.totalorder %s15, 0
      %p50 = por %p48, %p49
      %p51 = scmp.ne.s32.totalorder %s37, %s38
      %p52 = scmp.eq.s32.totalorder %s16, 1
      %p53 = por %p51, %p52
      %p55 = scmp.ne.s32.totalorder %s38, %s54
      %p56 = scmp.eq.s32.totalorder %s16, 0
      %p57 = por %p55, %p56
      %s58 = ssub.s32 %s17, %s29
      %p59 = scmp.eq.s32.totalorder %s58, 0
      %s61 = sadd.s32 %s60, 1
      %s62 = scalar_select %p59, %s60, %s61
      %p65 = pneg %p59
      %p66 = scmp.eq.s32.totalorder %s10, 1
      %p67 = por %p65, %p66
      %p68 = scmp.ne.s32.totalorder %s60, %s63
      %p69 = scmp.eq.s32.totalorder %s10, 0
      %p70 = por %p68, %p69
      %p71 = scmp.ne.s32.totalorder %s60, %s63
      %p72 = scmp.eq.s32.totalorder %s15, 1
      %p73 = por %p71, %p72
      %p74 = scmp.ne.s32.totalorder %s63, %s64
      %p75 = scmp.eq.s32.totalorder %s15, 0
      %p76 = por %p74, %p75
      %p77 = scmp.ne.s32.totalorder %s63, %s64
      %p78 = scmp.eq.s32.totalorder %s16, 1
      %p79 = por %p77, %p78
      %p81 = scmp.ne.s32.totalorder %s64, %s80
      %p82 = scmp.eq.s32.totalorder %s16, 0
      %p83 = por %p81, %p82
      %p84 = scmp.le.s32.totalorder 1, %s10
      %p85 = scmp.lt.s32.totalorder %s10, 3
      %p86 = pnand %p84, %p85
      %p87 = pneg %p86
      // Predicated region
      $region9: #{tpu_custom_call.1} parent=5 // pred_check
        _
      $region10: #{tpu_custom_call.1} parent=5 // pred_check_branch
        %89 = sbr.rel (%p86) target = $region12
      $region11: #{tpu_custom_call.1} parent=5 // pred_region
        %s90 = ssub.s32 %s10, 1
      $region12: #{tpu_custom_call.1} parent=5 // pred_fallthru
        _
      %p91 = scmp.lt.s32.totalorder %s10, 2
      // Predicated region
      $region13: #{tpu_custom_call.1} parent=5 // pred_check
        %p92 = pneg %p91
      $region14: #{tpu_custom_call.1} parent=5 // pred_check_branch
        %94 = sbr.rel (%p92) target = $region16
      $region15: #{tpu_custom_call.1} parent=5 // pred_region
        // Predicated region
        $region17: #{tpu_custom_call.1} parent=15 // pred_check
          %p95 = pneg %p44
        $region18: #{tpu_custom_call.1} parent=15 // pred_check_branch
          %97 = sbr.rel (%p95) target = $region20
        $region19: #{tpu_custom_call.1} parent=15 // pred_region
          %s98 = sand.u32 %s34, 1
          %s99 = scalar_lea.sflag [#allocation3], %s98
          %s100 = sand.u32 %s34, 1
          %s101 = smul.addr %s100, 64
          %s102 = scalar_lea.vmem [#allocation2], %s101
          %s103 = smul.u32 2, %s18
          %105 = vsyncadd %s99, 0
          %s106 = smul.addr %s17, 8
          %s107 = sadd.s32 %s103, %s106
          %s108 = smul.addr %s107, 8
          %s109 = scalar_lea.hbm %s0, %s108
          %s110 = sshll.u32 %s109, 4
          %s111 = int_to_ptr.hbm [resolvable:$true] %s110
          %s112 = sshll.u32 %s102, 4
          %s113 = int_to_ptr.vmem [resolvable:$true] %s112
          %118 = dma.hbm_to_vmem [thread:$0]  %s111, 1024, %s113, %s99, 256, 256, 16
        $region20: #{tpu_custom_call.1} parent=15 // pred_fallthru
          _
      $region16: #{tpu_custom_call.1} parent=5 // pred_fallthru
        _
      %p119 = scmp.le.s32.totalorder 1, %s10
      %p120 = scmp.lt.s32.totalorder %s10, 3
      %p121 = pnand %p119, %p120
      %p122 = pneg %p121
      // Predicated region
      $region21: #{tpu_custom_call.1} parent=5 // pred_check
        _
      $region22: #{tpu_custom_call.1} parent=5 // pred_check_branch
        %124 = sbr.rel (%p121) target = $region24
      $region23: #{tpu_custom_call.1} parent=5 // pred_region
        %s125 = ssub.s32 %s10, 1
        %s126 = sand.u32 %s37, 1
        %s127 = scalar_lea.sflag [#allocation3], %s126
        %s128 = sand.u32 %s37, 1
        %s129 = smul.addr %s128, 64
        %s130 = scalar_lea.vmem [#allocation2], %s129
        // Predicated region
        $region25: #{tpu_custom_call.1} parent=23 // pred_check
          %p131 = pneg %p50
        $region26: #{tpu_custom_call.1} parent=23 // pred_check_branch
          %133 = sbr.rel (%p131) target = $region28
        $region27: #{tpu_custom_call.1} parent=23 // pred_region
          %135 = dma.done %s127, 1024
        $region28: #{tpu_custom_call.1} parent=23 // pred_fallthru
          _
        %s136 = sand.u32 %s37, 1
        %s137 = scalar_lea.sflag [#allocation3], %s136
        %s138 = sand.u32 %s37, 1
        %s139 = smul.addr %s138, 64
        %s140 = scalar_lea.vmem [#allocation2], %s139
        %p141 = pneg %p50
        %p142 = pneg %p47
        %p143 = pneg %p76
        %p144 = pneg %p73
        %p145 = scmp.lt.s32.totalorder %s19, 1
        %s146 = scalar_select %p145, %s19, 1
        %s147 = smul.addr %s146, 4
        %s148 = smul.addr %s147, 8
        %s149 = scalar_lea.vmem %s1, %s148
        %s150 = smul.u32 2, %s20
        %p151 = scmp.lt.s32.totalorder %s19, 1
        %s152 = scalar_select %p151, %s19, 1
        %s153 = smul.addr %s152, 4
        %s154 = smul.addr %s153, 8
        %s155 = scalar_lea.vmem %s1, %s154
        %p156 = scmp.eq.s32.totalorder %s20, 0
        // Predicated region
        $region29: #{tpu_custom_call.1} parent=23 // pred_check
          %p157 = pneg %p156
        $region30: #{tpu_custom_call.1} parent=23 // pred_check_branch
          %159 = sbr.rel (%p157) target = $region32
        $region31: #{tpu_custom_call.1} parent=23 // pred_region
          %vm160 = vcmask 7168
          %161 = vst.msk [vmem:[%s155] sm:$0xff] %vm160, 0.0
          %162 = vst.msk [vmem:[%s155 + $0x8] sm:$0xff] %vm160, 0.0
          %163 = vst.msk [vmem:[%s155 + $0x10] sm:$0xff] %vm160, 0.0
          %164 = vst.msk [vmem:[%s155 + $0x18] sm:$0xff] %vm160, 0.0
        $region32: #{tpu_custom_call.1} parent=23 // pred_fallthru
          _
        %v165 = vld [vmem:[%s130] sm:$0xff]
        %v166 = vld [vmem:[%s130 + $0x8] sm:$0xff]
        %v167 = vld [vmem:[%s130 + $0x10] sm:$0xff]
        %v168 = vld [vmem:[%s130 + $0x18] sm:$0xff]
        %v169 = vld [vmem:[%s130 + $0x20] sm:$0xff]
        %v170 = vld [vmem:[%s130 + $0x28] sm:$0xff]
        %v171 = vld [vmem:[%s130 + $0x30] sm:$0xff]
        %v172 = vld [vmem:[%s130 + $0x38] sm:$0xff]
        %v173 = vld [vmem:[%s155] sm:$0xff]
        %v174 = vld [vmem:[%s155 + $0x8] sm:$0xff]
        %v175 = vld [vmem:[%s155 + $0x10] sm:$0xff]
        %v176 = vld [vmem:[%s155 + $0x18] sm:$0xff]
        %v177 = vadd.f32 %v165, %v166
        %178 = vadd.xlane.f32.xlu0 %v177
        %v179 = vpop.xlane.xlu0 %178
        %v180 = vadd.f32 %v167, %v168
        %181 = vadd.xlane.f32.xlu0 %v180
        %v182 = vpop.xlane.xlu0 %181
        %v183 = vadd.f32 %v169, %v170
        %184 = vadd.xlane.f32.xlu0 %v183
        %v185 = vpop.xlane.xlu0 %184
        %v186 = vadd.f32 %v171, %v172
        %187 = vadd.xlane.f32.xlu0 %v186
        %v188 = vpop.xlane.xlu0 %187
        %v189 = vadd.f32 %v173, %v179
        %v190 = vadd.f32 %v174, %v182
        %v191 = vadd.f32 %v175, %v185
        %v192 = vadd.f32 %v176, %v188
        %vm193 = vcmask 7168
        %194 = vst.msk [vmem:[%s155] sm:$0xff] %vm193, %v189
        %195 = vst.msk [vmem:[%s155 + $0x8] sm:$0xff] %vm193, %v190
        %196 = vst.msk [vmem:[%s155 + $0x10] sm:$0xff] %vm193, %v191
        %197 = vst.msk [vmem:[%s155 + $0x18] sm:$0xff] %vm193, %v192
        %p198 = scmp.lt.s32.totalorder %s19, 1
        %s199 = scalar_select %p198, %s19, 1
        %s200 = smul.addr %s199, 4
        %s201 = smul.addr %s200, 8
        %s202 = scalar_lea.vmem %s1, %s201
        // Predicated region
        $region33: #{tpu_custom_call.1} parent=23 // pred_check
          %p203 = pneg %p73
        $region34: #{tpu_custom_call.1} parent=23 // pred_check_branch
          %205 = sbr.rel (%p203) target = $region36
        $region35: #{tpu_custom_call.1} parent=23 // pred_region
          _
        $region36: #{tpu_custom_call.1} parent=23 // pred_fallthru
          _
      $region24: #{tpu_custom_call.1} parent=5 // pred_fallthru
        _
      %p206 = scmp.le.s32.totalorder 2, %s10
      // Predicated region
      $region37: #{tpu_custom_call.1} parent=5 // pred_check
        %p207 = pneg %p206
      $region38: #{tpu_custom_call.1} parent=5 // pred_check_branch
        %209 = sbr.rel (%p207) target = $region40
      $region39: #{tpu_custom_call.1} parent=5 // pred_region
        %s210 = ssub.s32 %s10, 2
        // Predicated region
        $region41: #{tpu_custom_call.1} parent=39 // pred_check
          %p211 = pneg %p79
        $region42: #{tpu_custom_call.1} parent=39 // pred_check_branch
          %213 = sbr.rel (%p211) target = $region44
        $region43: #{tpu_custom_call.1} parent=39 // pred_region
          %p214 = scmp.lt.s32.totalorder %s21, 1
          %s215 = scalar_select %p214, %s21, 1
          %s216 = smul.addr %s215, 4
          %s217 = smul.addr %s216, 8
          %s218 = scalar_lea.vmem %s1, %s217
        $region44: #{tpu_custom_call.1} parent=39 // pred_fallthru
          _
      $region40: #{tpu_custom_call.1} parent=5 // pred_fallthru
        _
    $region6: #{tpu_custom_call.1} parent=1 // loop_footer
      %s14 = sadd.s32 1, %s10
    $region7: #{tpu_custom_call.1} parent=1 // loop_footer_branch
      %9 = sbr.rel target = $region3
    $region8: #{tpu_custom_call.1} parent=1 // loop_exit
      _
    %219 = vsyncpa [#allocation3], 1
    %s220 = scalar_lea.sflag [#allocation3], 1
    %221 = vsyncpa %s220, 1

</llo_original>
